<compile_context>
chip_gen: v7x
topology: tpu7x:2x2x1
jax: 0.10.0
libtpu: 0.0.40
codegen_flags: <defaults>
</compile_context>

<pallas_src>
import functools

import jax
import jax.numpy as jnp
from jax.experimental import pallas as pl
from jax.experimental.pallas import tpu as pltpu


def _round_up(n: int, m: int) -> int:
    return ((n + m - 1) // m) * m


def _round_down(n: int, m: int) -> int:
    return (n // m) * m


def _net_kernel(x_ref, w1_ref, b1_ref, w2_ref, b2_ref, o_ref):
    """One lane tile of the MLP, computed feature-major (batch on lanes).

    Per grid step:
      x_ref : (LT, 4)  batch-major block streamed straight from the (Bp, 4)
                       input -- no wrapper-side transpose/copy.
      w1_ref: (4, 4)   PyTorch (out, in) layout.
      b1_ref: (4, 1)
      w2_ref: (3, 4)
      b2_ref: (3, 1)
      o_ref : (3, LT)  feature-major, lane-dense output slab (full 128-lane
                       unmasked stores).
    """
    x = x_ref[...]

    # fc1: h[o, b] = sum_i w1[o, i] * x[b, i]  -> (4, LT)
    # The batch->lane relayout is folded into the MXU contraction (both "in"
    # axes contracted), so there is no explicit relayout of the big operand.
    h = jax.lax.dot_general(
        w1_ref[...], x,
        dimension_numbers=(((1,), (1,)), ((), ())),
        preferred_element_type=jnp.float32,
        precision=jax.lax.Precision.HIGHEST,
    ) + b1_ref[...]

    h = jnp.maximum(h, 0.0)  # ReLU (VPU, per-lane)

    # fc2: logits = W2 @ h + b2 -> (3, LT)
    logits = jax.lax.dot_general(
        w2_ref[...], h,
        dimension_numbers=(((1,), (0,)), ((), ())),
        preferred_element_type=jnp.float32,
        precision=jax.lax.Precision.HIGHEST,
    ) + b2_ref[...]

    # Softmax over the 3 class logits (sublane axis 0). Lanes (= batch) are
    # independent, so padded / out-of-bounds lanes cannot contaminate real
    # ones.  Exact division (NOT pl.reciprocal(approx=True)): the kernel is
    # HBM-bound, so the approximate EUP reciprocal buys nothing and costs
    # ~1e-3 relative error in the normalization.
    m = jnp.max(logits, axis=0, keepdims=True)     # (1, LT)
    e = jnp.exp(logits - m)                        # (3, LT)  EUP
    denom = jnp.sum(e, axis=0, keepdims=True)      # (1, LT)  XLU reduce
    o_ref[...] = (e / denom).astype(o_ref.dtype)

    # TODO(synk): on v7x, recover sublane occupancy (only 4/8 and 3/8 rows
    # used per vreg) by packing two batch half-tiles onto the 8 sublanes with
    # block-diagonal W1(+)W1 / W2(+)W2 weights and per-group softmax reduces.


def _pick_lane_tile(bp: int, requested) -> int:
    """Lane (batch) tile selection.

    Big enough that per-step HBM traffic (~28 B/sample = 16 B in + 12 B out)
    dwarfs the ~0.35 us fixed per-grid-step overhead, small enough to keep
    >= ~8 grid steps (v7x megacore sharding + pipelined double buffering) and
    to fit VMEM:
      v5e (~0.82 TB/s HBM): >= ~128K lanes
      v6e (~1.4  TB/s)    : ~256K lanes
      v7x (~3.2  TB/s/TC) : ~384-512K lanes, but only 64 MiB VMEM/TC
    256K is a safe compromise without querying the chip generation.
    """
    if requested is None:
        requested = 256 * 1024
    lt = max(128, _round_up(int(requested), 128))    # guard: 128-lane multiple
    step_cap = max(128, _round_down(bp // 8, 128))   # keep >= ~8 grid steps
    return max(128, min(lt, step_cap, bp))


@functools.partial(jax.jit, static_argnames=("lane_tile", "out_dtype"))
def net_forward(x, w1, b1, w2, b2, *, lane_tile=None, out_dtype=jnp.float32):
    """Forward of Net: softmax(relu(x @ W1^T + b1) @ W2^T + b2, dim=1).

    x: (B, 4) f32; w1: (4, 4); b1: (4,); w2: (3, 4); b2: (3,)  ->  (B, 3).
    Set out_dtype=jnp.bfloat16 to halve output HBM write traffic (all
    arithmetic stays f32).
    """
    B = x.shape[0]

    # 128-lane alignment of the batch. This is the ONLY wrapper-side copy and
    # only happens for ragged batches; tile-granularity raggedness (Bp % LT)
    # is handled by the pl.cdiv grid + clipped edge blocks, not by padding to
    # a full tile.  (For a fully copy-free path, provide 128-aligned batches
    # or make the feature-major (4,B)/(3,B) layout the external contract.)
    Bp = _round_up(max(B, 1), 128)
    if Bp != B:
        x = jnp.pad(x, ((0, Bp - B), (0, 0)))

    LT = _pick_lane_tile(Bp, lane_tile)
    grid = (pl.cdiv(Bp, LT),)

    # Biases as (features, 1) columns -> broadcast along lanes in-kernel.
    b1c = b1.reshape(-1, 1).astype(jnp.float32)
    b2c = b2.reshape(-1, 1).astype(jnp.float32)

    out_fm = pl.pallas_call(
        _net_kernel,
        out_shape=jax.ShapeDtypeStruct((3, Bp), out_dtype),
        grid=grid,
        in_specs=[
            # x: (LT, 4) blocks walking the batch axis with the grid.
            pl.BlockSpec((LT, 4), lambda i: (i, 0)),
            # Weights / biases are grid-invariant (constant block index).
            pl.BlockSpec((4, 4), lambda i: (0, 0)),
            pl.BlockSpec((4, 1), lambda i: (0, 0)),
            pl.BlockSpec((3, 4), lambda i: (0, 0)),
            pl.BlockSpec((3, 1), lambda i: (0, 0)),
        ],
        # Lane-dense, feature-major output slab: unmasked 128-lane stores.
        out_specs=pl.BlockSpec((3, LT), lambda i: (0, i)),
        compiler_params=pltpu.CompilerParams(
            # Batch tiles are independent -> megacore sharding on v7x,
            # pipelined DMA on all generations.
            dimension_semantics=("parallel",),
            # Double-buffered in/out blocks + intermediates at LT=256K are
            # ~28 MiB; 48 MiB is safely under v7x's 64 MiB/TC physical VMEM
            # and well above v5e's 16 MiB scoped default.
            vmem_limit_bytes=48 * 1024 * 1024,
        ),
    )(x.astype(jnp.float32), w1, b1c, w2, b2c)

    # Back to the PyTorch (B, 3) contract; drop the alignment padding.
    # Under jit these fuse into the consumer.
    return out_fm[:, :B].T


def init_params(key):
    """Deterministic init matching nn.Linear shapes ((out, in) weights)."""
    k1, k2, k3, k4 = jax.random.split(key, 4)
    bound = 1.0 / jnp.sqrt(4.0)
    w1 = jax.random.uniform(k1, (4, 4), jnp.float32, -bound, bound)
    b1 = jax.random.uniform(k2, (4,), jnp.float32, -bound, bound)
    w2 = jax.random.uniform(k3, (3, 4), jnp.float32, -bound, bound)
    b2 = jax.random.uniform(k4, (3,), jnp.float32, -bound, bound)
    return w1, b1, w2, b2


def _reference(x, w1, b1, w2, b2):
    h = jnp.maximum(
        jnp.dot(x, w1.T, precision=jax.lax.Precision.HIGHEST) + b1, 0.0)
    logits = jnp.dot(h, w2.T, precision=jax.lax.Precision.HIGHEST) + b2
    return jax.nn.softmax(logits, axis=1)


if __name__ == "__main__":
    key = jax.random.PRNGKey(0)
    kx, kx2, kp = jax.random.split(key, 3)
    w1, b1, w2, b2 = init_params(kp)

    # Small iris-like batch: (B=8, features=4) -> single 128-lane tile.
    x = jax.random.normal(kx, (8, 4), dtype=jnp.float32)
    out = jax.block_until_ready(net_forward(x, w1, b1, w2, b2))
    ref = _reference(x, w1, b1, w2, b2)
    assert out.shape == (8, 3)
    assert jnp.allclose(out, ref, atol=1e-4, rtol=1e-4), float(
        jnp.max(jnp.abs(out - ref)))
    assert jnp.allclose(jnp.sum(out, axis=1), 1.0, atol=1e-4)

    # Larger, 128-unaligned batch exercises the multi-tile grid and the
    # alignment/ragged path.
    x2 = jax.random.normal(kx2, (1000, 4), dtype=jnp.float32)
    out2 = jax.block_until_ready(net_forward(x2, w1, b1, w2, b2))
    ref2 = _reference(x2, w1, b1, w2, b2)
    assert out2.shape == (1000, 3)
    assert jnp.allclose(out2, ref2, atol=1e-4, rtol=1e-4), float(
        jnp.max(jnp.abs(out2 - ref2)))

    print("KERNEL_OK")
</pallas_src>

<mosaic_0001>
module attributes {stable_mosaic.version = 11 : i64} {
  func.func @_net_kernel(%arg0: i32, %arg1: memref<128x4xf32, #tpu.memory_space<vmem>>, %arg2: memref<4x4xf32, #tpu.memory_space<vmem>>, %arg3: memref<4x1xf32, #tpu.memory_space<vmem>>, %arg4: memref<3x4xf32, #tpu.memory_space<vmem>>, %arg5: memref<3x1xf32, #tpu.memory_space<vmem>>, %arg6: memref<3x128xf32, #tpu.memory_space<vmem>>) attributes {dimension_semantics = [#tpu.dimension_semantics<parallel>], iteration_bounds = array<i64: 1>, scalar_prefetch = 0 : i64, scratch_operands = 0 : i64, tpu.core_type = #tpu.core_type<tc>, window_params = [{transform_indices = @transform_0, window_bounds = array<i64: 128, 4>}, {pipeline_mode = #tpu.pipeline_mode<synchronous>, transform_indices = @transform_1, window_bounds = array<i64: 4, 4>}, {pipeline_mode = #tpu.pipeline_mode<synchronous>, transform_indices = @transform_2, window_bounds = array<i64: 4, 1>}, {pipeline_mode = #tpu.pipeline_mode<synchronous>, transform_indices = @transform_3, window_bounds = array<i64: 3, 4>}, {pipeline_mode = #tpu.pipeline_mode<synchronous>, transform_indices = @transform_4, window_bounds = array<i64: 3, 1>}, {transform_indices = @transform_5, window_bounds = array<i64: 3, 128>}]} {
    %c0 = arith.constant 0 : index
    %c0_0 = arith.constant 0 : index
    %0 = vector.load %arg1[%c0, %c0_0] : memref<128x4xf32, #tpu.memory_space<vmem>>, vector<128x4xf32>
    %c0_1 = arith.constant 0 : index
    %c0_2 = arith.constant 0 : index
    %1 = vector.load %arg2[%c0_1, %c0_2] : memref<4x4xf32, #tpu.memory_space<vmem>>, vector<4x4xf32>
    %cst = arith.constant dense<0.000000e+00> : vector<4x128xf32>
    %2 = tpu.matmul %1, %0, %cst {dimension_numbers = #tpu.dot_dimension_numbers<[1], [1], [0], [0], [0, 0, 1, 0], [], []>, precision = #tpu.contract_precision<fp32>} : vector<4x4xf32>, vector<128x4xf32>, vector<4x128xf32> -> vector<4x128xf32>
    %c0_3 = arith.constant 0 : index
    %c0_4 = arith.constant 0 : index
    %3 = vector.load %arg3[%c0_3, %c0_4] : memref<4x1xf32, #tpu.memory_space<vmem>>, vector<4x1xf32>
    %4 = vector.broadcast %3 : vector<4x1xf32> to vector<4x128xf32>
    %5 = arith.addf %2, %4 : vector<4x128xf32>
    %cst_5 = arith.constant 0.000000e+00 : f32
    %6 = vector.broadcast %cst_5 : f32 to vector<4x128xf32>
    %7 = arith.maximumf %5, %6 : vector<4x128xf32>
    %c0_6 = arith.constant 0 : index
    %c0_7 = arith.constant 0 : index
    %8 = vector.load %arg4[%c0_6, %c0_7] : memref<3x4xf32, #tpu.memory_space<vmem>>, vector<3x4xf32>
    %cst_8 = arith.constant dense<0.000000e+00> : vector<3x128xf32>
    %9 = tpu.matmul %8, %7, %cst_8 {dimension_numbers = #tpu.dot_dimension_numbers<[1], [0], [0], [1], [0, 0, 1, 1], [], []>, precision = #tpu.contract_precision<fp32>} : vector<3x4xf32>, vector<4x128xf32>, vector<3x128xf32> -> vector<3x128xf32>
    %c0_9 = arith.constant 0 : index
    %c0_10 = arith.constant 0 : index
    %10 = vector.load %arg5[%c0_9, %c0_10] : memref<3x1xf32, #tpu.memory_space<vmem>>, vector<3x1xf32>
    %11 = vector.broadcast %10 : vector<3x1xf32> to vector<3x128xf32>
    %12 = arith.addf %9, %11 : vector<3x128xf32>
    %cst_11 = arith.constant dense<0xFF800000> : vector<128xf32>
    %13 = vector.multi_reduction <maximumf>, %12, %cst_11 [0] : vector<3x128xf32> to vector<128xf32>
    %14 = vector.shape_cast %13 : vector<128xf32> to vector<1x128xf32>
    %15 = vector.broadcast %14 : vector<1x128xf32> to vector<3x128xf32>
    %16 = arith.subf %12, %15 : vector<3x128xf32>
    %17 = math.exp %16 : vector<3x128xf32>
    %cst_12 = arith.constant dense<0.000000e+00> : vector<128xf32>
    %18 = vector.multi_reduction <add>, %17, %cst_12 [0] : vector<3x128xf32> to vector<128xf32>
    %19 = vector.shape_cast %18 : vector<128xf32> to vector<1x128xf32>
    %20 = vector.broadcast %19 : vector<1x128xf32> to vector<3x128xf32>
    %21 = arith.divf %17, %20 : vector<3x128xf32>
    %c0_13 = arith.constant 0 : index
    %c0_14 = arith.constant 0 : index
    %22 = vector.load %arg6[%c0_13, %c0_14] : memref<3x128xf32, #tpu.memory_space<vmem>>, vector<3x128xf32>
    tpu.vector_store %arg6[%c0_13, %c0_14], %21 {strides = array<i32>} : memref<3x128xf32, #tpu.memory_space<vmem>>, vector<3x128xf32>,
    return
  }
  func.func @transform_0(%arg0: i32) -> (i32, i32) {
    %c0_i32 = arith.constant 0 : i32
    %c0_i32_0 = arith.constant 0 : i32
    return %arg0, %c0_i32 : i32, i32
  }
  func.func @transform_1(%arg0: i32) -> (i32, i32) {
    %c0_i32 = arith.constant 0 : i32
    %c0_i32_0 = arith.constant 0 : i32
    %c0_i32_1 = arith.constant 0 : i32
    return %c0_i32, %c0_i32_0 : i32, i32
  }
  func.func @transform_2(%arg0: i32) -> (i32, i32) {
    %c0_i32 = arith.constant 0 : i32
    %c0_i32_0 = arith.constant 0 : i32
    %c0_i32_1 = arith.constant 0 : i32
    return %c0_i32, %c0_i32_0 : i32, i32
  }
  func.func @transform_3(%arg0: i32) -> (i32, i32) {
    %c0_i32 = arith.constant 0 : i32
    %c0_i32_0 = arith.constant 0 : i32
    %c0_i32_1 = arith.constant 0 : i32
    return %c0_i32, %c0_i32_0 : i32, i32
  }
  func.func @transform_4(%arg0: i32) -> (i32, i32) {
    %c0_i32 = arith.constant 0 : i32
    %c0_i32_0 = arith.constant 0 : i32
    %c0_i32_1 = arith.constant 0 : i32
    return %c0_i32, %c0_i32_0 : i32, i32
  }
  func.func @transform_5(%arg0: i32) -> (i32, i32) {
    %c0_i32 = arith.constant 0 : i32
    %c0_i32_0 = arith.constant 0 : i32
    return %c0_i32, %arg0 : i32, i32
  }
}

</mosaic_0001>

<llo_original>
// kernel: net_forward.1
$region0: #{net_forward.1}
  #allocation0 [shape = 'u32[]', space=smem, size = 0x4, offset = 0x4, fixed_abs, tag = 'smem constant byte address 0x4 - core index']
  #allocation1 [shape = 'u32[144,128]{1,0:T(1,128)}', space=vmem, size = 0x12000, scoped, tag = 'internal scratch']
  %s0 = inlined_call_operand.vmem [shape: f32[128,4], index: 0, kind: input, shape index: {}]
  %s1 = inlined_call_operand.vmem [shape: f32[4,4], index: 1, kind: input, shape index: {}]
  %s2 = inlined_call_operand.vmem [shape: f32[4,1], index: 2, kind: input, shape index: {}]
  %s3 = inlined_call_operand.vmem [shape: f32[3,4], index: 3, kind: input, shape index: {}]
  %s4 = inlined_call_operand.vmem [shape: f32[3,1], index: 4, kind: input, shape index: {}]
  %s5 = inlined_call_operand.vmem [shape: f32[3,128], index: 5, kind: output, shape index: {}]
  %s6 = sld [smem:[#allocation0]]
  $region30: #{net_forward.1} parent=0
    _
  %s8 = ssub.s32 1, %s6
  %s9 = scalar_select 0, %s8, %s6
  // Predicated region
  $region2: #{net_forward.1} parent=0 // pred_check
    _
  $region3: #{net_forward.1} parent=0 // pred_check_branch
    %11 = sbr.rel (0) target = $region5
  $region4: #{net_forward.1} parent=0 // pred_region
    _
  $region5: #{net_forward.1} parent=0 // pred_fallthru
    _
  // Predicated region
  $region6: #{net_forward.1} parent=0 // pred_check
    _
  $region7: #{net_forward.1} parent=0 // pred_check_branch
    %13 = sbr.rel (0) target = $region9
  $region8: #{net_forward.1} parent=0 // pred_region
    _
  $region9: #{net_forward.1} parent=0 // pred_fallthru
    _
  // Predicated region
  $region10: #{net_forward.1} parent=0 // pred_check
    _
  $region11: #{net_forward.1} parent=0 // pred_check_branch
    %15 = sbr.rel (0) target = $region13
  $region12: #{net_forward.1} parent=0 // pred_region
    _
  $region13: #{net_forward.1} parent=0 // pred_fallthru
    _
  // Predicated region
  $region14: #{net_forward.1} parent=0 // pred_check
    _
  $region15: #{net_forward.1} parent=0 // pred_check_branch
    %17 = sbr.rel (0) target = $region17
  $region16: #{net_forward.1} parent=0 // pred_region
    _
  $region17: #{net_forward.1} parent=0 // pred_fallthru
    _
  // Predicated region
  $region18: #{net_forward.1} parent=0 // pred_check
    _
  $region19: #{net_forward.1} parent=0 // pred_check_branch
    %19 = sbr.rel (0) target = $region21
  $region20: #{net_forward.1} parent=0 // pred_region
    _
  $region21: #{net_forward.1} parent=0 // pred_fallthru
    _
  %v20 = vld [vmem:[%s0] sm:$0xff]
  %v21 = vld [vmem:[%s0 + $0x8] sm:$0xff]
  %v22 = vld [vmem:[%s0 + $0x10] sm:$0xff]
  %v23 = vld [vmem:[%s0 + $0x18] sm:$0xff]
  %v24 = vld [vmem:[%s0 + $0x20] sm:$0xff]
  %v25 = vld [vmem:[%s0 + $0x28] sm:$0xff]
  %v26 = vld [vmem:[%s0 + $0x30] sm:$0xff]
  %v27 = vld [vmem:[%s0 + $0x38] sm:$0xff]
  %v28 = vld [vmem:[%s0 + $0x40] sm:$0xff]
  %v29 = vld [vmem:[%s0 + $0x48] sm:$0xff]
  %v30 = vld [vmem:[%s0 + $0x50] sm:$0xff]
  %v31 = vld [vmem:[%s0 + $0x58] sm:$0xff]
  %v32 = vld [vmem:[%s0 + $0x60] sm:$0xff]
  %v33 = vld [vmem:[%s0 + $0x68] sm:$0xff]
  %v34 = vld [vmem:[%s0 + $0x70] sm:$0xff]
  %v35 = vld [vmem:[%s0 + $0x78] sm:$0xff]
  %v36 = vld [vmem:[%s1] sm:$0xf]
  %v37 = vld [vmem:[%s2] sm:$0xf]
  %39 = vset.pattern.permute.xlu0 0
  %40 = vperm.xlu0 %39, %v37
  %v41 = vpop.permute.xlu0 %40
  %vm43 = vcmask 31744
  %v45 = vsel %vm43, %v36, 0
  %v48 = vsel %vm43, %v20, 0
  %v51 = vsel %vm43, %v21, 0
  %v54 = vsel %vm43, %v22, 0
  %v57 = vsel %vm43, %v23, 0
  %v60 = vsel %vm43, %v24, 0
  %v63 = vsel %vm43, %v25, 0
  %v66 = vsel %vm43, %v26, 0
  %v69 = vsel %vm43, %v27, 0
  %v72 = vsel %vm43, %v28, 0
  %v75 = vsel %vm43, %v29, 0
  %v78 = vsel %vm43, %v30, 0
  %v81 = vsel %vm43, %v31, 0
  %v84 = vsel %vm43, %v32, 0
  %v87 = vsel %vm43, %v33, 0
  %v90 = vsel %vm43, %v34, 0
  %v93 = vsel %vm43, %v35, 0
  %95 = vmatprep.subr.mxu0 0.0
  %v96 = vand.u32 %v48, 4294901760
  %97 = vmatpush1.xpose.msra.mxu0 %v96
  %98 = vmatprep.subr.mxu0 0.0
  %v99 = vand.u32 %v51, 4294901760
  %100 = vmatpush1.xpose.msra.mxu0 %v99
  %101 = vmatprep.subr.mxu0 0.0
  %v102 = vand.u32 %v54, 4294901760
  %103 = vmatpush1.xpose.msra.mxu0 %v102
  %104 = vmatprep.subr.mxu0 0.0
  %v105 = vand.u32 %v57, 4294901760
  %106 = vmatpush1.xpose.msra.mxu0 %v105
  %107 = vmatprep.subr.mxu0 0.0
  %v108 = vand.u32 %v60, 4294901760
  %109 = vmatpush1.xpose.msra.mxu0 %v108
  %110 = vmatprep.subr.mxu0 0.0
  %v111 = vand.u32 %v63, 4294901760
  %112 = vmatpush1.xpose.msra.mxu0 %v111
  %113 = vmatprep.subr.mxu0 0.0
  %v114 = vand.u32 %v66, 4294901760
  %115 = vmatpush1.xpose.msra.mxu0 %v114
  %116 = vmatprep.subr.mxu0 0.0
  %v117 = vand.u32 %v69, 4294901760
  %118 = vmatpush1.xpose.msra.mxu0 %v117
  %119 = vmatprep.subr.mxu0 0.0
  %v120 = vand.u32 %v72, 4294901760
  %121 = vmatpush1.xpose.msra.mxu0 %v120
  %122 = vmatprep.subr.mxu0 0.0
  %v123 = vand.u32 %v75, 4294901760
  %124 = vmatpush1.xpose.msra.mxu0 %v123
  %125 = vmatprep.subr.mxu0 0.0
  %v126 = vand.u32 %v78, 4294901760
  %127 = vmatpush1.xpose.msra.mxu0 %v126
  %128 = vmatprep.subr.mxu0 0.0
  %v129 = vand.u32 %v81, 4294901760
  %130 = vmatpush1.xpose.msra.mxu0 %v129
  %131 = vmatprep.subr.mxu0 0.0
  %v132 = vand.u32 %v84, 4294901760
  %133 = vmatpush1.xpose.msra.mxu0 %v132
  %134 = vmatprep.subr.mxu0 0.0
  %v135 = vand.u32 %v87, 4294901760
  %136 = vmatpush1.xpose.msra.mxu0 %v135
  %137 = vmatprep.subr.mxu0 0.0
  %v138 = vand.u32 %v90, 4294901760
  %139 = vmatpush1.xpose.msra.mxu0 %v138
  %140 = vmatprep.subr.mxu0 0.0
  %v141 = vand.u32 %v93, 4294901760
  %142 = vmatpush1.xpose.msra.mxu0 %v141
  %143 = vmatprep.subr.mxu0 0.0
  %144 = vmatpush1.xpose.msra.mxu0 0.0
  %145 = vmatprep.subr.mxu0 0.0
  %146 = vmatpush1.xpose.msra.mxu0 0.0
  %147 = vmatprep.subr.mxu0 0.0
  %148 = vmatpush1.xpose.msra.mxu0 0.0
  %149 = vmatprep.subr.mxu0 0.0
  %150 = vmatpush1.xpose.msra.mxu0 0.0
  %151 = vmatprep.subr.mxu0 0.0
  %152 = vmatpush1.xpose.msra.mxu0 0.0
  %153 = vmatprep.subr.mxu0 0.0
  %154 = vmatpush1.xpose.msra.mxu0 0.0
  %155 = vmatprep.subr.mxu0 0.0
  %156 = vmatpush1.xpose.msra.mxu0 0.0
  %157 = vmatprep.subr.mxu0 0.0
  %158 = vmatpush1.xpose.msra.mxu0 0.0
  %159 = vmatprep.subr.mxu0 0.0
  %160 = vmatpush1.xpose.msra.mxu0 0.0
  %161 = vmatprep.subr.mxu0 0.0
  %162 = vmatpush1.xpose.msra.mxu0 0.0
  %163 = vmatprep.subr.mxu0 0.0
  %164 = vmatpush1.xpose.msra.mxu0 0.0
  %165 = vmatprep.subr.mxu0 0.0
  %166 = vmatpush1.xpose.msra.mxu0 0.0
  %167 = vmatprep.subr.mxu0 0.0
  %168 = vmatpush1.xpose.msra.mxu0 0.0
  %169 = vmatprep.subr.mxu0 0.0
  %170 = vmatpush1.xpose.msra.mxu0 0.0
  %171 = vmatprep.subr.mxu0 0.0
  %172 = vmatpush1.xpose.msra.mxu0 0.0
  %173 = vmatprep.subr.mxu0 0.0
  %174 = vmatpush1.xpose.msra.mxu0 0.0
  %175 = vmatprep.mubr.f32.mxu0 0.0
  %v176 = vand.u32 %v45, 4294901760
  %v177 = vsub.f32 %v45, %v176
  %v178 = vand.u32 %v177, 4294901760
  %v179 = vsub.f32 %v177, %v178
  %v180 = vand.u32 %v179, 4294901760
  %181 = vmatmul.mubr.f32.gmra.mrb[0].mxu0 %v180
  %v182 = vpop.f32.mrb[0].mxu0
  %v183 = vadd.f32 %v41, %v182
  %v184 = vpop.f32.mrb[0].mxu0
  %185 = vdwg.mxu0
  %186 = vmatprep.subr.mxu0 0.0
  %v187 = vand.u32 %v48, 4294901760
  %v188 = vsub.f32 %v48, %v187
  %v189 = vand.u32 %v188, 4294901760
  %v190 = vsub.f32 %v188, %v189
  %v191 = vand.u32 %v190, 4294901760
  %192 = vmatpush1.xpose.msra.mxu0 %v191
  %193 = vmatprep.subr.mxu0 0.0
  %v194 = vand.u32 %v51, 4294901760
  %v195 = vsub.f32 %v51, %v194
  %v196 = vand.u32 %v195, 4294901760
  %v197 = vsub.f32 %v195, %v196
  %v198 = vand.u32 %v197, 4294901760
  %199 = vmatpush1.xpose.msra.mxu0 %v198
  %200 = vmatprep.subr.mxu0 0.0
  %v201 = vand.u32 %v54, 4294901760
  %v202 = vsub.f32 %v54, %v201
  %v203 = vand.u32 %v202, 4294901760
  %v204 = vsub.f32 %v202, %v203
  %v205 = vand.u32 %v204, 4294901760
  %206 = vmatpush1.xpose.msra.mxu0 %v205
  %207 = vmatprep.subr.mxu0 0.0
  %v208 = vand.u32 %v57, 4294901760
  %v209 = vsub.f32 %v57, %v208
  %v210 = vand.u32 %v209, 4294901760
  %v211 = vsub.f32 %v209, %v210
  %v212 = vand.u32 %v211, 4294901760
  %213 = vmatpush1.xpose.msra.mxu0 %v212
  %214 = vmatprep.subr.mxu0 0.0
  %v215 = vand.u32 %v60, 4294901760
  %v216 = vsub.f32 %v60, %v215
  %v217 = vand.u32 %v216, 4294901760
  %v218 = vsub.f32 %v216, %v217
  %v219 = vand.u32 %v218, 4294901760
  %220 = vmatpush1.xpose.msra.mxu0 %v219
  %221 = vmatprep.subr.mxu0 0.0
  %v222 = vand.u32 %v63, 4294901760
  %v223 = vsub.f32 %v63, %v222
  %v224 = vand.u32 %v223, 4294901760
  %v225 = vsub.f32 %v223, %v224
  %v226 = vand.u32 %v225, 4294901760
  %227 = vmatpush1.xpose.msra.mxu0 %v226
  %228 = vmatprep.subr.mxu0 0.0
  %v229 = vand.u32 %v66, 4294901760
  %v230 = vsub.f32 %v66, %v229
  %v231 = vand.u32 %v230, 4294901760
  %v232 = vsub.f32 %v230, %v231
  %v233 = vand.u32 %v232, 4294901760
  %234 = vmatpush1.xpose.msra.mxu0 %v233
  %235 = vmatprep.subr.mxu0 0.0
  %v236 = vand.u32 %v69, 4294901760
  %v237 = vsub.f32 %v69, %v236
  %v238 = vand.u32 %v237, 4294901760
  %v239 = vsub.f32 %v237, %v238
  %v240 = vand.u32 %v239, 4294901760
  %241 = vmatpush1.xpose.msra.mxu0 %v240
  %242 = vmatprep.subr.mxu0 0.0
  %v243 = vand.u32 %v72, 4294901760
  %v244 = vsub.f32 %v72, %v243
  %v245 = vand.u32 %v244, 4294901760
  %v246 = vsub.f32 %v244, %v245
  %v247 = vand.u32 %v246, 4294901760
  %248 = vmatpush1.xpose.msra.mxu0 %v247
  %249 = vmatprep.subr.mxu0 0.0
  %v250 = vand.u32 %v75, 4294901760
  %v251 = vsub.f32 %v75, %v250
  %v252 = vand.u32 %v251, 4294901760
  %v253 = vsub.f32 %v251, %v252
  %v254 = vand.u32 %v253, 4294901760
  %255 = vmatpush1.xpose.msra.mxu0 %v254
  %256 = vmatprep.subr.mxu0 0.0
  %v257 = vand.u32 %v78, 4294901760
  %v258 = vsub.f32 %v78, %v257
  %v259 = vand.u32 %v258, 4294901760
  %v260 = vsub.f32 %v258, %v259
  %v261 = vand.u32 %v260, 4294901760
  %262 = vmatpush1.xpose.msra.mxu0 %v261
  %263 = vmatprep.subr.mxu0 0.0
  %v264 = vand.u32 %v81, 4294901760
  %v265 = vsub.f32 %v81, %v264
  %v266 = vand.u32 %v265, 4294901760
  %v267 = vsub.f32 %v265, %v266
  %v268 = vand.u32 %v267, 4294901760
  %269 = vmatpush1.xpose.msra.mxu0 %v268
  %270 = vmatprep.subr.mxu0 0.0
  %v271 = vand.u32 %v84, 4294901760
  %v272 = vsub.f32 %v84, %v271
  %v273 = vand.u32 %v272, 4294901760
  %v274 = vsub.f32 %v272, %v273
  %v275 = vand.u32 %v274, 4294901760
  %276 = vmatpush1.xpose.msra.mxu0 %v275
  %277 = vmatprep.subr.mxu0 0.0
  %v278 = vand.u32 %v87, 4294901760
  %v279 = vsub.f32 %v87, %v278
  %v280 = vand.u32 %v279, 4294901760
  %v281 = vsub.f32 %v279, %v280
  %v282 = vand.u32 %v281, 4294901760
  %283 = vmatpush1.xpose.msra.mxu0 %v282
  %284 = vmatprep.subr.mxu0 0.0
  %v285 = vand.u32 %v90, 4294901760
  %v286 = vsub.f32 %v90, %v285
  %v287 = vand.u32 %v286, 4294901760
  %v288 = vsub.f32 %v286, %v287
  %v289 = vand.u32 %v288, 4294901760
  %290 = vmatpush1.xpose.msra.mxu0 %v289
  %291 = vmatprep.subr.mxu0 0.0
  %v292 = vand.u32 %v93, 4294901760
  %v293 = vsub.f32 %v93, %v292
  %v294 = vand.u32 %v293, 4294901760
  %v295 = vsub.f32 %v293, %v294
  %v296 = vand.u32 %v295, 4294901760
  %297 = vmatpush1.xpose.msra.mxu0 %v296
  %298 = vmatprep.subr.mxu0 0.0
  %299 = vmatpush1.xpose.msra.mxu0 0.0
  %300 = vmatprep.subr.mxu0 0.0
  %301 = vmatpush1.xpose.msra.mxu0 0.0
  %302 = vmatprep.subr.mxu0 0.0
  %303 = vmatpush1.xpose.msra.mxu0 0.0
  %304 = vmatprep.subr.mxu0 0.0
  %305 = vmatpush1.xpose.msra.mxu0 0.0
  %306 = vmatprep.subr.mxu0 0.0
  %307 = vmatpush1.xpose.msra.mxu0 0.0
  %308 = vmatprep.subr.mxu0 0.0
  %309 = vmatpush1.xpose.msra.mxu0 0.0
  %310 = vmatprep.subr.mxu0 0.0
  %311 = vmatpush1.xpose.msra.mxu0 0.0
  %312 = vmatprep.subr.mxu0 0.0
  %313 = vmatpush1.xpose.msra.mxu0 0.0
  %314 = vmatprep.subr.mxu0 0.0
  %315 = vmatpush1.xpose.msra.mxu0 0.0
  %316 = vmatprep.subr.mxu0 0.0
  %317 = vmatpush1.xpose.msra.mxu0 0.0
  %318 = vmatprep.subr.mxu0 0.0
  %319 = vmatpush1.xpose.msra.mxu0 0.0
  %320 = vmatprep.subr.mxu0 0.0
  %321 = vmatpush1.xpose.msra.mxu0 0.0
  %322 = vmatprep.subr.mxu0 0.0
  %323 = vmatpush1.xpose.msra.mxu0 0.0
  %324 = vmatprep.subr.mxu0 0.0
  %325 = vmatpush1.xpose.msra.mxu0 0.0
  %326 = vmatprep.subr.mxu0 0.0
  %327 = vmatpush1.xpose.msra.mxu0 0.0
  %328 = vmatprep.subr.mxu0 0.0
  %329 = vmatpush1.xpose.msra.mxu0 0.0
  %330 = vmatprep.mubr.f32.mxu0 0.0
  %v331 = vand.u32 %v45, 4294901760
  %332 = vmatmul.mubr.f32.gmra.mrb[0].mxu0 %v331
  %v333 = vpop.f32.mrb[0].mxu0
  %v334 = vadd.f32 %v183, %v333
  %v335 = vpop.f32.mrb[0].mxu0
  %336 = vdwg.mxu0
  %337 = vmatprep.subr.mxu0 0.0
  %v338 = vand.u32 %v48, 4294901760
  %v339 = vsub.f32 %v48, %v338
  %340 = vmatpush1.xpose.msra.mxu0 %v339
  %341 = vmatprep.subr.mxu0 0.0
  %v342 = vand.u32 %v51, 4294901760
  %v343 = vsub.f32 %v51, %v342
  %344 = vmatpush1.xpose.msra.mxu0 %v343
  %345 = vmatprep.subr.mxu0 0.0
  %v346 = vand.u32 %v54, 4294901760
  %v347 = vsub.f32 %v54, %v346
  %348 = vmatpush1.xpose.msra.mxu0 %v347
  %349 = vmatprep.subr.mxu0 0.0
  %v350 = vand.u32 %v57, 4294901760
  %v351 = vsub.f32 %v57, %v350
  %352 = vmatpush1.xpose.msra.mxu0 %v351
  %353 = vmatprep.subr.mxu0 0.0
  %v354 = vand.u32 %v60, 4294901760
  %v355 = vsub.f32 %v60, %v354
  %356 = vmatpush1.xpose.msra.mxu0 %v355
  %357 = vmatprep.subr.mxu0 0.0
  %v358 = vand.u32 %v63, 4294901760
  %v359 = vsub.f32 %v63, %v358
  %360 = vmatpush1.xpose.msra.mxu0 %v359
  %361 = vmatprep.subr.mxu0 0.0
  %v362 = vand.u32 %v66, 4294901760
  %v363 = vsub.f32 %v66, %v362
  %364 = vmatpush1.xpose.msra.mxu0 %v363
  %365 = vmatprep.subr.mxu0 0.0
  %v366 = vand.u32 %v69, 4294901760
  %v367 = vsub.f32 %v69, %v366
  %368 = vmatpush1.xpose.msra.mxu0 %v367
  %369 = vmatprep.subr.mxu0 0.0
  %v370 = vand.u32 %v72, 4294901760
  %v371 = vsub.f32 %v72, %v370
  %372 = vmatpush1.xpose.msra.mxu0 %v371
  %373 = vmatprep.subr.mxu0 0.0
  %v374 = vand.u32 %v75, 4294901760
  %v375 = vsub.f32 %v75, %v374
  %376 = vmatpush1.xpose.msra.mxu0 %v375
  %377 = vmatprep.subr.mxu0 0.0
  %v378 = vand.u32 %v78, 4294901760
  %v379 = vsub.f32 %v78, %v378
  %380 = vmatpush1.xpose.msra.mxu0 %v379
  %381 = vmatprep.subr.mxu0 0.0
  %v382 = vand.u32 %v81, 4294901760
  %v383 = vsub.f32 %v81, %v382
  %384 = vmatpush1.xpose.msra.mxu0 %v383
  %385 = vmatprep.subr.mxu0 0.0
  %v386 = vand.u32 %v84, 4294901760
  %v387 = vsub.f32 %v84, %v386
  %388 = vmatpush1.xpose.msra.mxu0 %v387
  %389 = vmatprep.subr.mxu0 0.0
  %v390 = vand.u32 %v87, 4294901760
  %v391 = vsub.f32 %v87, %v390
  %392 = vmatpush1.xpose.msra.mxu0 %v391
  %393 = vmatprep.subr.mxu0 0.0
  %v394 = vand.u32 %v90, 4294901760
  %v395 = vsub.f32 %v90, %v394
  %396 = vmatpush1.xpose.msra.mxu0 %v395
  %397 = vmatprep.subr.mxu0 0.0
  %v398 = vand.u32 %v93, 4294901760
  %v399 = vsub.f32 %v93, %v398
  %400 = vmatpush1.xpose.msra.mxu0 %v399
  %401 = vmatprep.subr.mxu0 0.0
  %402 = vmatpush1.xpose.msra.mxu0 0.0
  %403 = vmatprep.subr.mxu0 0.0
  %404 = vmatpush1.xpose.msra.mxu0 0.0
  %405 = vmatprep.subr.mxu0 0.0
  %406 = vmatpush1.xpose.msra.mxu0 0.0
  %407 = vmatprep.subr.mxu0 0.0
  %408 = vmatpush1.xpose.msra.mxu0 0.0
  %409 = vmatprep.subr.mxu0 0.0
  %410 = vmatpush1.xpose.msra.mxu0 0.0
  %411 = vmatprep.subr.mxu0 0.0
  %412 = vmatpush1.xpose.msra.mxu0 0.0
  %413 = vmatprep.subr.mxu0 0.0
  %414 = vmatpush1.xpose.msra.mxu0 0.0
  %415 = vmatprep.subr.mxu0 0.0
  %416 = vmatpush1.xpose.msra.mxu0 0.0
  %417 = vmatprep.subr.mxu0 0.0
  %418 = vmatpush1.xpose.msra.mxu0 0.0
  %419 = vmatprep.subr.mxu0 0.0
  %420 = vmatpush1.xpose.msra.mxu0 0.0
  %421 = vmatprep.subr.mxu0 0.0
  %422 = vmatpush1.xpose.msra.mxu0 0.0
  %423 = vmatprep.subr.mxu0 0.0
  %424 = vmatpush1.xpose.msra.mxu0 0.0
  %425 = vmatprep.subr.mxu0 0.0
  %426 = vmatpush1.xpose.msra.mxu0 0.0
  %427 = vmatprep.subr.mxu0 0.0
  %428 = vmatpush1.xpose.msra.mxu0 0.0
  %429 = vmatprep.subr.mxu0 0.0
  %430 = vmatpush1.xpose.msra.mxu0 0.0
  %431 = vmatprep.subr.mxu0 0.0
  %432 = vmatpush1.xpose.msra.mxu0 0.0
  %433 = vmatprep.mubr.f32.mxu0 0.0
  %v434 = vand.u32 %v45, 4294901760
  %v435 = vsub.f32 %v45, %v434
  %436 = vmatmul.mubr.f32.gmra.mrb[0].mxu0 %v435
  %v437 = vpop.f32.mrb[0].mxu0
  %v438 = vadd.f32 %v334, %v437
  %v439 = vpop.f32.mrb[0].mxu0
  %440 = vdwg.mxu0
  %441 = vmatprep.subr.mxu0 0.0
  %v442 = vand.u32 %v48, 4294901760
  %443 = vmatpush1.xpose.msra.mxu0 %v442
  %444 = vmatprep.subr.mxu0 0.0
  %v445 = vand.u32 %v51, 4294901760
  %446 = vmatpush1.xpose.msra.mxu0 %v445
  %447 = vmatprep.subr.mxu0 0.0
  %v448 = vand.u32 %v54, 4294901760
  %449 = vmatpush1.xpose.msra.mxu0 %v448
  %450 = vmatprep.subr.mxu0 0.0
  %v451 = vand.u32 %v57, 4294901760
  %452 = vmatpush1.xpose.msra.mxu0 %v451
  %453 = vmatprep.subr.mxu0 0.0
  %v454 = vand.u32 %v60, 4294901760
  %455 = vmatpush1.xpose.msra.mxu0 %v454
  %456 = vmatprep.subr.mxu0 0.0
  %v457 = vand.u32 %v63, 4294901760
  %458 = vmatpush1.xpose.msra.mxu0 %v457
  %459 = vmatprep.subr.mxu0 0.0
  %v460 = vand.u32 %v66, 4294901760
  %461 = vmatpush1.xpose.msra.mxu0 %v460
  %462 = vmatprep.subr.mxu0 0.0
  %v463 = vand.u32 %v69, 4294901760
  %464 = vmatpush1.xpose.msra.mxu0 %v463
  %465 = vmatprep.subr.mxu0 0.0
  %v466 = vand.u32 %v72, 4294901760
  %467 = vmatpush1.xpose.msra.mxu0 %v466
  %468 = vmatprep.subr.mxu0 0.0
  %v469 = vand.u32 %v75, 4294901760
  %470 = vmatpush1.xpose.msra.mxu0 %v469
  %471 = vmatprep.subr.mxu0 0.0
  %v472 = vand.u32 %v78, 4294901760
  %473 = vmatpush1.xpose.msra.mxu0 %v472
  %474 = vmatprep.subr.mxu0 0.0
  %v475 = vand.u32 %v81, 4294901760
  %476 = vmatpush1.xpose.msra.mxu0 %v475
  %477 = vmatprep.subr.mxu0 0.0
  %v478 = vand.u32 %v84, 4294901760
  %479 = vmatpush1.xpose.msra.mxu0 %v478
  %480 = vmatprep.subr.mxu0 0.0
  %v481 = vand.u32 %v87, 4294901760
  %482 = vmatpush1.xpose.msra.mxu0 %v481
  %483 = vmatprep.subr.mxu0 0.0
  %v484 = vand.u32 %v90, 4294901760
  %485 = vmatpush1.xpose.msra.mxu0 %v484
  %486 = vmatprep.subr.mxu0 0.0
  %v487 = vand.u32 %v93, 4294901760
  %488 = vmatpush1.xpose.msra.mxu0 %v487
  %489 = vmatprep.subr.mxu0 0.0
  %490 = vmatpush1.xpose.msra.mxu0 0.0
  %491 = vmatprep.subr.mxu0 0.0
  %492 = vmatpush1.xpose.msra.mxu0 0.0
  %493 = vmatprep.subr.mxu0 0.0
  %494 = vmatpush1.xpose.msra.mxu0 0.0
  %495 = vmatprep.subr.mxu0 0.0
  %496 = vmatpush1.xpose.msra.mxu0 0.0
  %497 = vmatprep.subr.mxu0 0.0
  %498 = vmatpush1.xpose.msra.mxu0 0.0
  %499 = vmatprep.subr.mxu0 0.0
  %500 = vmatpush1.xpose.msra.mxu0 0.0
  %501 = vmatprep.subr.mxu0 0.0
  %502 = vmatpush1.xpose.msra.mxu0 0.0
  %503 = vmatprep.subr.mxu0 0.0
  %504 = vmatpush1.xpose.msra.mxu0 0.0
  %505 = vmatprep.subr.mxu0 0.0
  %506 = vmatpush1.xpose.msra.mxu0 0.0
  %507 = vmatprep.subr.mxu0 0.0
  %508 = vmatpush1.xpose.msra.mxu0 0.0
  %509 = vmatprep.subr.mxu0 0.0
  %510 = vmatpush1.xpose.msra.mxu0 0.0
  %511 = vmatprep.subr.mxu0 0.0
  %512 = vmatpush1.xpose.msra.mxu0 0.0
  %513 = vmatprep.subr.mxu0 0.0
  %514 = vmatpush1.xpose.msra.mxu0 0.0
  %515 = vmatprep.subr.mxu0 0.0
  %516 = vmatpush1.xpose.msra.mxu0 0.0
  %517 = vmatprep.subr.mxu0 0.0
  %518 = vmatpush1.xpose.msra.mxu0 0.0
  %519 = vmatprep.subr.mxu0 0.0
  %520 = vmatpush1.xpose.msra.mxu0 0.0
  %521 = vmatprep.mubr.f32.mxu0 0.0
  %v522 = vand.u32 %v45, 4294901760
  %v523 = vsub.f32 %v45, %v522
  %v524 = vand.u32 %v523, 4294901760
  %525 = vmatmul.mubr.f32.gmra.mrb[0].mxu0 %v524
  %v526 = vpop.f32.mrb[0].mxu0
  %v527 = vadd.f32 %v438, %v526
  %v528 = vpop.f32.mrb[0].mxu0
  %529 = vdwg.mxu0
  %530 = vmatprep.subr.mxu0 0.0
  %v531 = vand.u32 %v48, 4294901760
  %v532 = vsub.f32 %v48, %v531
  %v533 = vand.u32 %v532, 4294901760
  %534 = vmatpush1.xpose.msra.mxu0 %v533
  %535 = vmatprep.subr.mxu0 0.0
  %v536 = vand.u32 %v51, 4294901760
  %v537 = vsub.f32 %v51, %v536
  %v538 = vand.u32 %v537, 4294901760
  %539 = vmatpush1.xpose.msra.mxu0 %v538
  %540 = vmatprep.subr.mxu0 0.0
  %v541 = vand.u32 %v54, 4294901760
  %v542 = vsub.f32 %v54, %v541
  %v543 = vand.u32 %v542, 4294901760
  %544 = vmatpush1.xpose.msra.mxu0 %v543
  %545 = vmatprep.subr.mxu0 0.0
  %v546 = vand.u32 %v57, 4294901760
  %v547 = vsub.f32 %v57, %v546
  %v548 = vand.u32 %v547, 4294901760
  %549 = vmatpush1.xpose.msra.mxu0 %v548
  %550 = vmatprep.subr.mxu0 0.0
  %v551 = vand.u32 %v60, 4294901760
  %v552 = vsub.f32 %v60, %v551
  %v553 = vand.u32 %v552, 4294901760
  %554 = vmatpush1.xpose.msra.mxu0 %v553
  %555 = vmatprep.subr.mxu0 0.0
  %v556 = vand.u32 %v63, 4294901760
  %v557 = vsub.f32 %v63, %v556
  %v558 = vand.u32 %v557, 4294901760
  %559 = vmatpush1.xpose.msra.mxu0 %v558
  %560 = vmatprep.subr.mxu0 0.0
  %v561 = vand.u32 %v66, 4294901760
  %v562 = vsub.f32 %v66, %v561
  %v563 = vand.u32 %v562, 4294901760
  %564 = vmatpush1.xpose.msra.mxu0 %v563
  %565 = vmatprep.subr.mxu0 0.0
  %v566 = vand.u32 %v69, 4294901760
  %v567 = vsub.f32 %v69, %v566
  %v568 = vand.u32 %v567, 4294901760
  %569 = vmatpush1.xpose.msra.mxu0 %v568
  %570 = vmatprep.subr.mxu0 0.0
  %v571 = vand.u32 %v72, 4294901760
  %v572 = vsub.f32 %v72, %v571
  %v573 = vand.u32 %v572, 4294901760
  %574 = vmatpush1.xpose.msra.mxu0 %v573
  %575 = vmatprep.subr.mxu0 0.0
  %v576 = vand.u32 %v75, 4294901760
  %v577 = vsub.f32 %v75, %v576
  %v578 = vand.u32 %v577, 4294901760
  %579 = vmatpush1.xpose.msra.mxu0 %v578
  %580 = vmatprep.subr.mxu0 0.0
  %v581 = vand.u32 %v78, 4294901760
  %v582 = vsub.f32 %v78, %v581
  %v583 = vand.u32 %v582, 4294901760
  %584 = vmatpush1.xpose.msra.mxu0 %v583
  %585 = vmatprep.subr.mxu0 0.0
  %v586 = vand.u32 %v81, 4294901760
  %v587 = vsub.f32 %v81, %v586
  %v588 = vand.u32 %v587, 4294901760
  %589 = vmatpush1.xpose.msra.mxu0 %v588
  %590 = vmatprep.subr.mxu0 0.0
  %v591 = vand.u32 %v84, 4294901760
  %v592 = vsub.f32 %v84, %v591
  %v593 = vand.u32 %v592, 4294901760
  %594 = vmatpush1.xpose.msra.mxu0 %v593
  %595 = vmatprep.subr.mxu0 0.0
  %v596 = vand.u32 %v87, 4294901760
  %v597 = vsub.f32 %v87, %v596
  %v598 = vand.u32 %v597, 4294901760
  %599 = vmatpush1.xpose.msra.mxu0 %v598
  %600 = vmatprep.subr.mxu0 0.0
  %v601 = vand.u32 %v90, 4294901760
  %v602 = vsub.f32 %v90, %v601
  %v603 = vand.u32 %v602, 4294901760
  %604 = vmatpush1.xpose.msra.mxu0 %v603
  %605 = vmatprep.subr.mxu0 0.0
  %v606 = vand.u32 %v93, 4294901760
  %v607 = vsub.f32 %v93, %v606
  %v608 = vand.u32 %v607, 4294901760
  %609 = vmatpush1.xpose.msra.mxu0 %v608
  %610 = vmatprep.subr.mxu0 0.0
  %611 = vmatpush1.xpose.msra.mxu0 0.0
  %612 = vmatprep.subr.mxu0 0.0
  %613 = vmatpush1.xpose.msra.mxu0 0.0
  %614 = vmatprep.subr.mxu0 0.0
  %615 = vmatpush1.xpose.msra.mxu0 0.0
  %616 = vmatprep.subr.mxu0 0.0
  %617 = vmatpush1.xpose.msra.mxu0 0.0
  %618 = vmatprep.subr.mxu0 0.0
  %619 = vmatpush1.xpose.msra.mxu0 0.0
  %620 = vmatprep.subr.mxu0 0.0
  %621 = vmatpush1.xpose.msra.mxu0 0.0
  %622 = vmatprep.subr.mxu0 0.0
  %623 = vmatpush1.xpose.msra.mxu0 0.0
  %624 = vmatprep.subr.mxu0 0.0
  %625 = vmatpush1.xpose.msra.mxu0 0.0
  %626 = vmatprep.subr.mxu0 0.0
  %627 = vmatpush1.xpose.msra.mxu0 0.0
  %628 = vmatprep.subr.mxu0 0.0
  %629 = vmatpush1.xpose.msra.mxu0 0.0
  %630 = vmatprep.subr.mxu0 0.0
  %631 = vmatpush1.xpose.msra.mxu0 0.0
  %632 = vmatprep.subr.mxu0 0.0
  %633 = vmatpush1.xpose.msra.mxu0 0.0
  %634 = vmatprep.subr.mxu0 0.0
  %635 = vmatpush1.xpose.msra.mxu0 0.0
  %636 = vmatprep.subr.mxu0 0.0
  %637 = vmatpush1.xpose.msra.mxu0 0.0
  %638 = vmatprep.subr.mxu0 0.0
  %639 = vmatpush1.xpose.msra.mxu0 0.0
  %640 = vmatprep.subr.mxu0 0.0
  %641 = vmatpush1.xpose.msra.mxu0 0.0
  %642 = vmatprep.mubr.f32.mxu0 0.0
  %v643 = vand.u32 %v45, 4294901760
  %644 = vmatmul.mubr.f32.gmra.mrb[0].mxu0 %v643
  %v645 = vpop.f32.mrb[0].mxu0
  %v646 = vadd.f32 %v527, %v645
  %v647 = vpop.f32.mrb[0].mxu0
  %648 = vdwg.mxu0
  %649 = vmatprep.subr.mxu0 0.0
  %v650 = vand.u32 %v48, 4294901760
  %651 = vmatpush1.xpose.msra.mxu0 %v650
  %652 = vmatprep.subr.mxu0 0.0
  %v653 = vand.u32 %v51, 4294901760
  %654 = vmatpush1.xpose.msra.mxu0 %v653
  %655 = vmatprep.subr.mxu0 0.0
  %v656 = vand.u32 %v54, 4294901760
  %657 = vmatpush1.xpose.msra.mxu0 %v656
  %658 = vmatprep.subr.mxu0 0.0
  %v659 = vand.u32 %v57, 4294901760
  %660 = vmatpush1.xpose.msra.mxu0 %v659
  %661 = vmatprep.subr.mxu0 0.0
  %v662 = vand.u32 %v60, 4294901760
  %663 = vmatpush1.xpose.msra.mxu0 %v662
  %664 = vmatprep.subr.mxu0 0.0
  %v665 = vand.u32 %v63, 4294901760
  %666 = vmatpush1.xpose.msra.mxu0 %v665
  %667 = vmatprep.subr.mxu0 0.0
  %v668 = vand.u32 %v66, 4294901760
  %669 = vmatpush1.xpose.msra.mxu0 %v668
  %670 = vmatprep.subr.mxu0 0.0
  %v671 = vand.u32 %v69, 4294901760
  %672 = vmatpush1.xpose.msra.mxu0 %v671
  %673 = vmatprep.subr.mxu0 0.0
  %v674 = vand.u32 %v72, 4294901760
  %675 = vmatpush1.xpose.msra.mxu0 %v674
  %676 = vmatprep.subr.mxu0 0.0
  %v677 = vand.u32 %v75, 4294901760
  %678 = vmatpush1.xpose.msra.mxu0 %v677
  %679 = vmatprep.subr.mxu0 0.0
  %v680 = vand.u32 %v78, 4294901760
  %681 = vmatpush1.xpose.msra.mxu0 %v680
  %682 = vmatprep.subr.mxu0 0.0
  %v683 = vand.u32 %v81, 4294901760
  %684 = vmatpush1.xpose.msra.mxu0 %v683
  %685 = vmatprep.subr.mxu0 0.0
  %v686 = vand.u32 %v84, 4294901760
  %687 = vmatpush1.xpose.msra.mxu0 %v686
  %688 = vmatprep.subr.mxu0 0.0
  %v689 = vand.u32 %v87, 4294901760
  %690 = vmatpush1.xpose.msra.mxu0 %v689
  %691 = vmatprep.subr.mxu0 0.0
  %v692 = vand.u32 %v90, 4294901760
  %693 = vmatpush1.xpose.msra.mxu0 %v692
  %694 = vmatprep.subr.mxu0 0.0
  %v695 = vand.u32 %v93, 4294901760
  %696 = vmatpush1.xpose.msra.mxu0 %v695
  %697 = vmatprep.subr.mxu0 0.0
  %698 = vmatpush1.xpose.msra.mxu0 0.0
  %699 = vmatprep.subr.mxu0 0.0
  %700 = vmatpush1.xpose.msra.mxu0 0.0
  %701 = vmatprep.subr.mxu0 0.0
  %702 = vmatpush1.xpose.msra.mxu0 0.0
  %703 = vmatprep.subr.mxu0 0.0
  %704 = vmatpush1.xpose.msra.mxu0 0.0
  %705 = vmatprep.subr.mxu0 0.0
  %706 = vmatpush1.xpose.msra.mxu0 0.0
  %707 = vmatprep.subr.mxu0 0.0
  %708 = vmatpush1.xpose.msra.mxu0 0.0
  %709 = vmatprep.subr.mxu0 0.0
  %710 = vmatpush1.xpose.msra.mxu0 0.0
  %711 = vmatprep.subr.mxu0 0.0
  %712 = vmatpush1.xpose.msra.mxu0 0.0
  %713 = vmatprep.subr.mxu0 0.0
  %714 = vmatpush1.xpose.msra.mxu0 0.0
  %715 = vmatprep.subr.mxu0 0.0
  %716 = vmatpush1.xpose.msra.mxu0 0.0
  %717 = vmatprep.subr.mxu0 0.0
  %718 = vmatpush1.xpose.msra.mxu0 0.0
  %719 = vmatprep.subr.mxu0 0.0
  %720 = vmatpush1.xpose.msra.mxu0 0.0
  %721 = vmatprep.subr.mxu0 0.0
  %722 = vmatpush1.xpose.msra.mxu0 0.0
  %723 = vmatprep.subr.mxu0 0.0
  %724 = vmatpush1.xpose.msra.mxu0 0.0
  %725 = vmatprep.subr.mxu0 0.0
  %726 = vmatpush1.xpose.msra.mxu0 0.0
  %727 = vmatprep.subr.mxu0 0.0
  %728 = vmatpush1.xpose.msra.mxu0 0.0
  %729 = vmatprep.mubr.f32.mxu0 0.0
  %v730 = vand.u32 %v45, 4294901760
  %731 = vmatmul.mubr.f32.gmra.mrb[0].mxu0 %v730
  %v732 = vpop.f32.mrb[0].mxu0
  %v733 = vadd.f32 %v646, %v732
  %v734 = vpop.f32.mrb[0].mxu0
  %735 = vdwg.mxu0
  %v736 = vmax.f32 %v733, 0.0
  %v737 = vld [vmem:[%s3] sm:$0x7]
  %v738 = vld [vmem:[%s4] sm:$0x7]
  %740 = vset.pattern.permute.xlu0 0
  %741 = vperm.xlu0 %740, %v738
  %v742 = vpop.permute.xlu0 %741
  %v745 = vsel %vm43, %v737, 0
  %vm747 = vcmask 1043456
  %v749 = vsel %vm747, %v736, 0
  %751 = vmatprep.subr.mxu0 0.0
  %v752 = vand.u32 %v749, 4294901760
  %753 = vmatpush1.msra.mxu0 %v752
  %754 = vmatprep.subr.mxu0 0.0
  %755 = vmatpush1.msra.mxu0 0.0
  %756 = vmatprep.subr.mxu0 0.0
  %757 = vmatpush1.msra.mxu0 0.0
  %758 = vmatprep.subr.mxu0 0.0
  %759 = vmatpush1.msra.mxu0 0.0
  %760 = vmatprep.subr.mxu0 0.0
  %761 = vmatpush1.msra.mxu0 0.0
  %762 = vmatprep.subr.mxu0 0.0
  %763 = vmatpush1.msra.mxu0 0.0
  %764 = vmatprep.subr.mxu0 0.0
  %765 = vmatpush1.msra.mxu0 0.0
  %766 = vmatprep.subr.mxu0 0.0
  %767 = vmatpush1.msra.mxu0 0.0
  %768 = vmatprep.subr.mxu0 0.0
  %769 = vmatpush1.msra.mxu0 0.0
  %770 = vmatprep.subr.mxu0 0.0
  %771 = vmatpush1.msra.mxu0 0.0
  %772 = vmatprep.subr.mxu0 0.0
  %773 = vmatpush1.msra.mxu0 0.0
  %774 = vmatprep.subr.mxu0 0.0
  %775 = vmatpush1.msra.mxu0 0.0
  %776 = vmatprep.subr.mxu0 0.0
  %777 = vmatpush1.msra.mxu0 0.0
  %778 = vmatprep.subr.mxu0 0.0
  %779 = vmatpush1.msra.mxu0 0.0
  %780 = vmatprep.subr.mxu0 0.0
  %781 = vmatpush1.msra.mxu0 0.0
  %782 = vmatprep.subr.mxu0 0.0
  %783 = vmatpush1.msra.mxu0 0.0
  %784 = vmatprep.subr.mxu0 0.0
  %785 = vmatpush1.msra.mxu0 0.0
  %786 = vmatprep.subr.mxu0 0.0
  %787 = vmatpush1.msra.mxu0 0.0
  %788 = vmatprep.subr.mxu0 0.0
  %789 = vmatpush1.msra.mxu0 0.0
  %790 = vmatprep.subr.mxu0 0.0
  %791 = vmatpush1.msra.mxu0 0.0
  %792 = vmatprep.subr.mxu0 0.0
  %793 = vmatpush1.msra.mxu0 0.0
  %794 = vmatprep.subr.mxu0 0.0
  %795 = vmatpush1.msra.mxu0 0.0
  %796 = vmatprep.subr.mxu0 0.0
  %797 = vmatpush1.msra.mxu0 0.0
  %798 = vmatprep.subr.mxu0 0.0
  %799 = vmatpush1.msra.mxu0 0.0
  %800 = vmatprep.subr.mxu0 0.0
  %801 = vmatpush1.msra.mxu0 0.0
  %802 = vmatprep.subr.mxu0 0.0
  %803 = vmatpush1.msra.mxu0 0.0
  %804 = vmatprep.subr.mxu0 0.0
  %805 = vmatpush1.msra.mxu0 0.0
  %806 = vmatprep.subr.mxu0 0.0
  %807 = vmatpush1.msra.mxu0 0.0
  %808 = vmatprep.subr.mxu0 0.0
  %809 = vmatpush1.msra.mxu0 0.0
  %810 = vmatprep.subr.mxu0 0.0
  %811 = vmatpush1.msra.mxu0 0.0
  %812 = vmatprep.subr.mxu0 0.0
  %813 = vmatpush1.msra.mxu0 0.0
  %814 = vmatprep.subr.mxu0 0.0
  %815 = vmatpush1.msra.mxu0 0.0
  %816 = vmatprep.mubr.f32.mxu0 0.0
  %v817 = vand.u32 %v745, 4294901760
  %v818 = vsub.f32 %v745, %v817
  %v819 = vand.u32 %v818, 4294901760
  %v820 = vsub.f32 %v818, %v819
  %v821 = vand.u32 %v820, 4294901760
  %822 = vmatmul.mubr.f32.gmra.mrb[0].mxu0 %v821
  %v823 = vpop.f32.mrb[0].mxu0
  %v824 = vadd.f32 %v742, %v823
  %v825 = vpop.f32.mrb[0].mxu0
  %826 = vdwg.mxu0
  %827 = vmatprep.subr.mxu0 0.0
  %v828 = vand.u32 %v749, 4294901760
  %v829 = vsub.f32 %v749, %v828
  %v830 = vand.u32 %v829, 4294901760
  %v831 = vsub.f32 %v829, %v830
  %v832 = vand.u32 %v831, 4294901760
  %833 = vmatpush1.msra.mxu0 %v832
  %834 = vmatprep.subr.mxu0 0.0
  %835 = vmatpush1.msra.mxu0 0.0
  %836 = vmatprep.subr.mxu0 0.0
  %837 = vmatpush1.msra.mxu0 0.0
  %838 = vmatprep.subr.mxu0 0.0
  %839 = vmatpush1.msra.mxu0 0.0
  %840 = vmatprep.subr.mxu0 0.0
  %841 = vmatpush1.msra.mxu0 0.0
  %842 = vmatprep.subr.mxu0 0.0
  %843 = vmatpush1.msra.mxu0 0.0
  %844 = vmatprep.subr.mxu0 0.0
  %845 = vmatpush1.msra.mxu0 0.0
  %846 = vmatprep.subr.mxu0 0.0
  %847 = vmatpush1.msra.mxu0 0.0
  %848 = vmatprep.subr.mxu0 0.0
  %849 = vmatpush1.msra.mxu0 0.0
  %850 = vmatprep.subr.mxu0 0.0
  %851 = vmatpush1.msra.mxu0 0.0
  %852 = vmatprep.subr.mxu0 0.0
  %853 = vmatpush1.msra.mxu0 0.0
  %854 = vmatprep.subr.mxu0 0.0
  %855 = vmatpush1.msra.mxu0 0.0
  %856 = vmatprep.subr.mxu0 0.0
  %857 = vmatpush1.msra.mxu0 0.0
  %858 = vmatprep.subr.mxu0 0.0
  %859 = vmatpush1.msra.mxu0 0.0
  %860 = vmatprep.subr.mxu0 0.0
  %861 = vmatpush1.msra.mxu0 0.0
  %862 = vmatprep.subr.mxu0 0.0
  %863 = vmatpush1.msra.mxu0 0.0
  %864 = vmatprep.subr.mxu0 0.0
  %865 = vmatpush1.msra.mxu0 0.0
  %866 = vmatprep.subr.mxu0 0.0
  %867 = vmatpush1.msra.mxu0 0.0
  %868 = vmatprep.subr.mxu0 0.0
  %869 = vmatpush1.msra.mxu0 0.0
  %870 = vmatprep.subr.mxu0 0.0
  %871 = vmatpush1.msra.mxu0 0.0
  %872 = vmatprep.subr.mxu0 0.0
  %873 = vmatpush1.msra.mxu0 0.0
  %874 = vmatprep.subr.mxu0 0.0
  %875 = vmatpush1.msra.mxu0 0.0
  %876 = vmatprep.subr.mxu0 0.0
  %877 = vmatpush1.msra.mxu0 0.0
  %878 = vmatprep.subr.mxu0 0.0
  %879 = vmatpush1.msra.mxu0 0.0
  %880 = vmatprep.subr.mxu0 0.0
  %881 = vmatpush1.msra.mxu0 0.0
  %882 = vmatprep.subr.mxu0 0.0
  %883 = vmatpush1.msra.mxu0 0.0
  %884 = vmatprep.subr.mxu0 0.0
  %885 = vmatpush1.msra.mxu0 0.0
  %886 = vmatprep.subr.mxu0 0.0
  %887 = vmatpush1.msra.mxu0 0.0
  %888 = vmatprep.subr.mxu0 0.0
  %889 = vmatpush1.msra.mxu0 0.0
  %890 = vmatprep.subr.mxu0 0.0
  %891 = vmatpush1.msra.mxu0 0.0
  %892 = vmatprep.subr.mxu0 0.0
  %893 = vmatpush1.msra.mxu0 0.0
  %894 = vmatprep.subr.mxu0 0.0
  %895 = vmatpush1.msra.mxu0 0.0
  %896 = vmatprep.mubr.f32.mxu0 0.0
  %v897 = vand.u32 %v745, 4294901760
  %898 = vmatmul.mubr.f32.gmra.mrb[0].mxu0 %v897
  %v899 = vpop.f32.mrb[0].mxu0
  %v900 = vadd.f32 %v824, %v899
  %v901 = vpop.f32.mrb[0].mxu0
  %902 = vdwg.mxu0
  %903 = vmatprep.subr.mxu0 0.0
  %v904 = vand.u32 %v749, 4294901760
  %v905 = vsub.f32 %v749, %v904
  %906 = vmatpush1.msra.mxu0 %v905
  %907 = vmatprep.subr.mxu0 0.0
  %908 = vmatpush1.msra.mxu0 0.0
  %909 = vmatprep.subr.mxu0 0.0
  %910 = vmatpush1.msra.mxu0 0.0
  %911 = vmatprep.subr.mxu0 0.0
  %912 = vmatpush1.msra.mxu0 0.0
  %913 = vmatprep.subr.mxu0 0.0
  %914 = vmatpush1.msra.mxu0 0.0
  %915 = vmatprep.subr.mxu0 0.0
  %916 = vmatpush1.msra.mxu0 0.0
  %917 = vmatprep.subr.mxu0 0.0
  %918 = vmatpush1.msra.mxu0 0.0
  %919 = vmatprep.subr.mxu0 0.0
  %920 = vmatpush1.msra.mxu0 0.0
  %921 = vmatprep.subr.mxu0 0.0
  %922 = vmatpush1.msra.mxu0 0.0
  %923 = vmatprep.subr.mxu0 0.0
  %924 = vmatpush1.msra.mxu0 0.0
  %925 = vmatprep.subr.mxu0 0.0
  %926 = vmatpush1.msra.mxu0 0.0
  %927 = vmatprep.subr.mxu0 0.0
  %928 = vmatpush1.msra.mxu0 0.0
  %929 = vmatprep.subr.mxu0 0.0
  %930 = vmatpush1.msra.mxu0 0.0
  %931 = vmatprep.subr.mxu0 0.0
  %932 = vmatpush1.msra.mxu0 0.0
  %933 = vmatprep.subr.mxu0 0.0
  %934 = vmatpush1.msra.mxu0 0.0
  %935 = vmatprep.subr.mxu0 0.0
  %936 = vmatpush1.msra.mxu0 0.0
  %937 = vmatprep.subr.mxu0 0.0
  %938 = vmatpush1.msra.mxu0 0.0
  %939 = vmatprep.subr.mxu0 0.0
  %940 = vmatpush1.msra.mxu0 0.0
  %941 = vmatprep.subr.mxu0 0.0
  %942 = vmatpush1.msra.mxu0 0.0
  %943 = vmatprep.subr.mxu0 0.0
  %944 = vmatpush1.msra.mxu0 0.0
  %945 = vmatprep.subr.mxu0 0.0
  %946 = vmatpush1.msra.mxu0 0.0
  %947 = vmatprep.subr.mxu0 0.0
  %948 = vmatpush1.msra.mxu0 0.0
  %949 = vmatprep.subr.mxu0 0.0
  %950 = vmatpush1.msra.mxu0 0.0
  %951 = vmatprep.subr.mxu0 0.0
  %952 = vmatpush1.msra.mxu0 0.0
  %953 = vmatprep.subr.mxu0 0.0
  %954 = vmatpush1.msra.mxu0 0.0
  %955 = vmatprep.subr.mxu0 0.0
  %956 = vmatpush1.msra.mxu0 0.0
  %957 = vmatprep.subr.mxu0 0.0
  %958 = vmatpush1.msra.mxu0 0.0
  %959 = vmatprep.subr.mxu0 0.0
  %960 = vmatpush1.msra.mxu0 0.0
  %961 = vmatprep.subr.mxu0 0.0
  %962 = vmatpush1.msra.mxu0 0.0
  %963 = vmatprep.subr.mxu0 0.0
  %964 = vmatpush1.msra.mxu0 0.0
  %965 = vmatprep.subr.mxu0 0.0
  %966 = vmatpush1.msra.mxu0 0.0
  %967 = vmatprep.subr.mxu0 0.0
  %968 = vmatpush1.msra.mxu0 0.0
  %969 = vmatprep.mubr.f32.mxu0 0.0
  %v970 = vand.u32 %v745, 4294901760
  %v971 = vsub.f32 %v745, %v970
  %972 = vmatmul.mubr.f32.gmra.mrb[0].mxu0 %v971
  %v973 = vpop.f32.mrb[0].mxu0
  %v974 = vadd.f32 %v900, %v973
  %v975 = vpop.f32.mrb[0].mxu0
  %976 = vdwg.mxu0
  %977 = vmatprep.subr.mxu0 0.0
  %v978 = vand.u32 %v749, 4294901760
  %979 = vmatpush1.msra.mxu0 %v978
  %980 = vmatprep.subr.mxu0 0.0
  %981 = vmatpush1.msra.mxu0 0.0
  %982 = vmatprep.subr.mxu0 0.0
  %983 = vmatpush1.msra.mxu0 0.0
  %984 = vmatprep.subr.mxu0 0.0
  %985 = vmatpush1.msra.mxu0 0.0
  %986 = vmatprep.subr.mxu0 0.0
  %987 = vmatpush1.msra.mxu0 0.0
  %988 = vmatprep.subr.mxu0 0.0
  %989 = vmatpush1.msra.mxu0 0.0
  %990 = vmatprep.subr.mxu0 0.0
  %991 = vmatpush1.msra.mxu0 0.0
  %992 = vmatprep.subr.mxu0 0.0
  %993 = vmatpush1.msra.mxu0 0.0
  %994 = vmatprep.subr.mxu0 0.0
  %995 = vmatpush1.msra.mxu0 0.0
  %996 = vmatprep.subr.mxu0 0.0
  %997 = vmatpush1.msra.mxu0 0.0
  %998 = vmatprep.subr.mxu0 0.0
  %999 = vmatpush1.msra.mxu0 0.0
  %1000 = vmatprep.subr.mxu0 0.0
  %1001 = vmatpush1.msra.mxu0 0.0
  %1002 = vmatprep.subr.mxu0 0.0
  %1003 = vmatpush1.msra.mxu0 0.0
  %1004 = vmatprep.subr.mxu0 0.0
  %1005 = vmatpush1.msra.mxu0 0.0
  %1006 = vmatprep.subr.mxu0 0.0
  %1007 = vmatpush1.msra.mxu0 0.0
  %1008 = vmatprep.subr.mxu0 0.0
  %1009 = vmatpush1.msra.mxu0 0.0
  %1010 = vmatprep.subr.mxu0 0.0
  %1011 = vmatpush1.msra.mxu0 0.0
  %1012 = vmatprep.subr.mxu0 0.0
  %1013 = vmatpush1.msra.mxu0 0.0
  %1014 = vmatprep.subr.mxu0 0.0
  %1015 = vmatpush1.msra.mxu0 0.0
  %1016 = vmatprep.subr.mxu0 0.0
  %1017 = vmatpush1.msra.mxu0 0.0
  %1018 = vmatprep.subr.mxu0 0.0
  %1019 = vmatpush1.msra.mxu0 0.0
  %1020 = vmatprep.subr.mxu0 0.0
  %1021 = vmatpush1.msra.mxu0 0.0
  %1022 = vmatprep.subr.mxu0 0.0
  %1023 = vmatpush1.msra.mxu0 0.0
  %1024 = vmatprep.subr.mxu0 0.0
  %1025 = vmatpush1.msra.mxu0 0.0
  %1026 = vmatprep.subr.mxu0 0.0
  %1027 = vmatpush1.msra.mxu0 0.0
  %1028 = vmatprep.subr.mxu0 0.0
  %1029 = vmatpush1.msra.mxu0 0.0
  %1030 = vmatprep.subr.mxu0 0.0
  %1031 = vmatpush1.msra.mxu0 0.0
  %1032 = vmatprep.subr.mxu0 0.0
  %1033 = vmatpush1.msra.mxu0 0.0
  %1034 = vmatprep.subr.mxu0 0.0
  %1035 = vmatpush1.msra.mxu0 0.0
  %1036 = vmatprep.subr.mxu0 0.0
  %1037 = vmatpush1.msra.mxu0 0.0
  %1038 = vmatprep.subr.mxu0 0.0
  %1039 = vmatpush1.msra.mxu0 0.0
  %1040 = vmatprep.subr.mxu0 0.0
  %1041 = vmatpush1.msra.mxu0 0.0
  %1042 = vmatprep.mubr.f32.mxu0 0.0
  %v1043 = vand.u32 %v745, 4294901760
  %v1044 = vsub.f32 %v745, %v1043
  %v1045 = vand.u32 %v1044, 4294901760
  %1046 = vmatmul.mubr.f32.gmra.mrb[0].mxu0 %v1045
  %v1047 = vpop.f32.mrb[0].mxu0
  %v1048 = vadd.f32 %v974, %v1047
  %v1049 = vpop.f32.mrb[0].mxu0
  %1050 = vdwg.mxu0
  %1051 = vmatprep.subr.mxu0 0.0
  %v1052 = vand.u32 %v749, 4294901760
  %v1053 = vsub.f32 %v749, %v1052
  %v1054 = vand.u32 %v1053, 4294901760
  %1055 = vmatpush1.msra.mxu0 %v1054
  %1056 = vmatprep.subr.mxu0 0.0
  %1057 = vmatpush1.msra.mxu0 0.0
  %1058 = vmatprep.subr.mxu0 0.0
  %1059 = vmatpush1.msra.mxu0 0.0
  %1060 = vmatprep.subr.mxu0 0.0
  %1061 = vmatpush1.msra.mxu0 0.0
  %1062 = vmatprep.subr.mxu0 0.0
  %1063 = vmatpush1.msra.mxu0 0.0
  %1064 = vmatprep.subr.mxu0 0.0
  %1065 = vmatpush1.msra.mxu0 0.0
  %1066 = vmatprep.subr.mxu0 0.0
  %1067 = vmatpush1.msra.mxu0 0.0
  %1068 = vmatprep.subr.mxu0 0.0
  %1069 = vmatpush1.msra.mxu0 0.0
  %1070 = vmatprep.subr.mxu0 0.0
  %1071 = vmatpush1.msra.mxu0 0.0
  %1072 = vmatprep.subr.mxu0 0.0
  %1073 = vmatpush1.msra.mxu0 0.0
  %1074 = vmatprep.subr.mxu0 0.0
  %1075 = vmatpush1.msra.mxu0 0.0
  %1076 = vmatprep.subr.mxu0 0.0
  %1077 = vmatpush1.msra.mxu0 0.0
  %1078 = vmatprep.subr.mxu0 0.0
  %1079 = vmatpush1.msra.mxu0 0.0
  %1080 = vmatprep.subr.mxu0 0.0
  %1081 = vmatpush1.msra.mxu0 0.0
  %1082 = vmatprep.subr.mxu0 0.0
  %1083 = vmatpush1.msra.mxu0 0.0
  %1084 = vmatprep.subr.mxu0 0.0
  %1085 = vmatpush1.msra.mxu0 0.0
  %1086 = vmatprep.subr.mxu0 0.0
  %1087 = vmatpush1.msra.mxu0 0.0
  %1088 = vmatprep.subr.mxu0 0.0
  %1089 = vmatpush1.msra.mxu0 0.0
  %1090 = vmatprep.subr.mxu0 0.0
  %1091 = vmatpush1.msra.mxu0 0.0
  %1092 = vmatprep.subr.mxu0 0.0
  %1093 = vmatpush1.msra.mxu0 0.0
  %1094 = vmatprep.subr.mxu0 0.0
  %1095 = vmatpush1.msra.mxu0 0.0
  %1096 = vmatprep.subr.mxu0 0.0
  %1097 = vmatpush1.msra.mxu0 0.0
  %1098 = vmatprep.subr.mxu0 0.0
  %1099 = vmatpush1.msra.mxu0 0.0
  %1100 = vmatprep.subr.mxu0 0.0
  %1101 = vmatpush1.msra.mxu0 0.0
  %1102 = vmatprep.subr.mxu0 0.0
  %1103 = vmatpush1.msra.mxu0 0.0
  %1104 = vmatprep.subr.mxu0 0.0
  %1105 = vmatpush1.msra.mxu0 0.0
  %1106 = vmatprep.subr.mxu0 0.0
  %1107 = vmatpush1.msra.mxu0 0.0
  %1108 = vmatprep.subr.mxu0 0.0
  %1109 = vmatpush1.msra.mxu0 0.0
  %1110 = vmatprep.subr.mxu0 0.0
  %1111 = vmatpush1.msra.mxu0 0.0
  %1112 = vmatprep.subr.mxu0 0.0
  %1113 = vmatpush1.msra.mxu0 0.0
  %1114 = vmatprep.subr.mxu0 0.0
  %1115 = vmatpush1.msra.mxu0 0.0
  %1116 = vmatprep.subr.mxu0 0.0
  %1117 = vmatpush1.msra.mxu0 0.0
  %1118 = vmatprep.mubr.f32.mxu0 0.0
  %v1119 = vand.u32 %v745, 4294901760
  %1120 = vmatmul.mubr.f32.gmra.mrb[0].mxu0 %v1119
  %v1121 = vpop.f32.mrb[0].mxu0
  %v1122 = vadd.f32 %v1048, %v1121
  %v1123 = vpop.f32.mrb[0].mxu0
  %1124 = vdwg.mxu0
  %1125 = vmatprep.subr.mxu0 0.0
  %v1126 = vand.u32 %v749, 4294901760
  %1127 = vmatpush1.msra.mxu0 %v1126
  %1128 = vmatprep.subr.mxu0 0.0
  %1129 = vmatpush1.msra.mxu0 0.0
  %1130 = vmatprep.subr.mxu0 0.0
  %1131 = vmatpush1.msra.mxu0 0.0
  %1132 = vmatprep.subr.mxu0 0.0
  %1133 = vmatpush1.msra.mxu0 0.0
  %1134 = vmatprep.subr.mxu0 0.0
  %1135 = vmatpush1.msra.mxu0 0.0
  %1136 = vmatprep.subr.mxu0 0.0
  %1137 = vmatpush1.msra.mxu0 0.0
  %1138 = vmatprep.subr.mxu0 0.0
  %1139 = vmatpush1.msra.mxu0 0.0
  %1140 = vmatprep.subr.mxu0 0.0
  %1141 = vmatpush1.msra.mxu0 0.0
  %1142 = vmatprep.subr.mxu0 0.0
  %1143 = vmatpush1.msra.mxu0 0.0
  %1144 = vmatprep.subr.mxu0 0.0
  %1145 = vmatpush1.msra.mxu0 0.0
  %1146 = vmatprep.subr.mxu0 0.0
  %1147 = vmatpush1.msra.mxu0 0.0
  %1148 = vmatprep.subr.mxu0 0.0
  %1149 = vmatpush1.msra.mxu0 0.0
  %1150 = vmatprep.subr.mxu0 0.0
  %1151 = vmatpush1.msra.mxu0 0.0
  %1152 = vmatprep.subr.mxu0 0.0
  %1153 = vmatpush1.msra.mxu0 0.0
  %1154 = vmatprep.subr.mxu0 0.0
  %1155 = vmatpush1.msra.mxu0 0.0
  %1156 = vmatprep.subr.mxu0 0.0
  %1157 = vmatpush1.msra.mxu0 0.0
  %1158 = vmatprep.subr.mxu0 0.0
  %1159 = vmatpush1.msra.mxu0 0.0
  %1160 = vmatprep.subr.mxu0 0.0
  %1161 = vmatpush1.msra.mxu0 0.0
  %1162 = vmatprep.subr.mxu0 0.0
  %1163 = vmatpush1.msra.mxu0 0.0
  %1164 = vmatprep.subr.mxu0 0.0
  %1165 = vmatpush1.msra.mxu0 0.0
  %1166 = vmatprep.subr.mxu0 0.0
  %1167 = vmatpush1.msra.mxu0 0.0
  %1168 = vmatprep.subr.mxu0 0.0
  %1169 = vmatpush1.msra.mxu0 0.0
  %1170 = vmatprep.subr.mxu0 0.0
  %1171 = vmatpush1.msra.mxu0 0.0
  %1172 = vmatprep.subr.mxu0 0.0
  %1173 = vmatpush1.msra.mxu0 0.0
  %1174 = vmatprep.subr.mxu0 0.0
  %1175 = vmatpush1.msra.mxu0 0.0
  %1176 = vmatprep.subr.mxu0 0.0
  %1177 = vmatpush1.msra.mxu0 0.0
  %1178 = vmatprep.subr.mxu0 0.0
  %1179 = vmatpush1.msra.mxu0 0.0
  %1180 = vmatprep.subr.mxu0 0.0
  %1181 = vmatpush1.msra.mxu0 0.0
  %1182 = vmatprep.subr.mxu0 0.0
  %1183 = vmatpush1.msra.mxu0 0.0
  %1184 = vmatprep.subr.mxu0 0.0
  %1185 = vmatpush1.msra.mxu0 0.0
  %1186 = vmatprep.subr.mxu0 0.0
  %1187 = vmatpush1.msra.mxu0 0.0
  %1188 = vmatprep.subr.mxu0 0.0
  %1189 = vmatpush1.msra.mxu0 0.0
  %1190 = vmatprep.mubr.f32.mxu0 0.0
  %v1191 = vand.u32 %v745, 4294901760
  %1192 = vmatmul.mubr.f32.gmra.mrb[0].mxu0 %v1191
  %v1193 = vpop.f32.mrb[0].mxu0
  %v1194 = vadd.f32 %v1122, %v1193
  %v1195 = vpop.f32.mrb[0].mxu0
  %1196 = vdwg.mxu0
  %vm1197 = vcmask 1042432
  %v1198 = vsel %vm1197, %v1194, -inf
  %v1199 = vrot.slane %v1198, 4
  %v1200 = vmax.f32 %v1198, %v1199
  %v1201 = vrot.slane %v1200, 2
  %v1202 = vmax.f32 %v1200, %v1201
  %v1203 = vrot.slane %v1202, 1
  %v1204 = vmax.f32 %v1202, %v1203
  %v1205 = vsub.f32 %v1194, %v1204
  %v1206 = vmul.f32 %v1205, 1.442695
  %v1207 = vpow.pop %v1206
  %v1208 = vsel %vm1197, %v1207, 0.0
  %v1209 = vrot.slane %v1208, 4
  %v1210 = vadd.f32 %v1208, %v1209
  %v1211 = vrot.slane %v1210, 2
  %v1212 = vadd.f32 %v1210, %v1211
  %v1213 = vrot.slane %v1212, 1
  %v1214 = vadd.f32 %v1212, %v1213
  %v1215 = vrcp.pop %v1214
  %v1216 = vmul.f32 %v1207, %v1215
  %1217 = vst [vmem:[%s5] sm:$0x7] %v1216
  // Predicated region
  $region22: #{net_forward.1} parent=0 // pred_check
    _
  $region23: #{net_forward.1} parent=0 // pred_check_branch
    %1219 = sbr.rel (0) target = $region25
  $region24: #{net_forward.1} parent=0 // pred_region
    _
  $region25: #{net_forward.1} parent=0 // pred_fallthru
    _
  // Predicated region
  $region26: #{net_forward.1} parent=0 // pred_check
    _
  $region27: #{net_forward.1} parent=0 // pred_check_branch
    %1221 = sbr.rel (0) target = $region29
  $region28: #{net_forward.1} parent=0 // pred_region
    _
  $region29: #{net_forward.1} parent=0 // pred_fallthru
    _

</llo_original>
